<compile_context>
chip_gen: v7x
topology: tpu7x:2x2x1
jax: 0.10.0
libtpu: 0.0.40
codegen_flags: <defaults>
</compile_context>

<pallas_src>
import jax
import jax.numpy as jnp
from jax.experimental import pallas as pl
from jax.experimental.pallas import tpu as pltpu

L1_COEFF = 0.5
WEIGHT_NORMALIZE_EPS = 1e-8


def _ae_kernel(h_ref, we_ref, wd_ref, be_ref, bd_ref, selh_ref, seli_ref,
               acts_ref, hrec_ref, l1_ref, l2_ref):
    """One batch tile.  All blocks are 2-D and lane-dense:
         h_ref    (TB, N*I) f32     we_ref  (N*I, N*H)     wd_ref  (N*H, N*I)
         be_ref   (1, N*H)  f32     bd_ref  (1, N*I)  f32
         selh_ref (N*H, N)  f32     seli_ref(N*I, N)  f32  (segment sum / mean)
         acts_ref (TB, N*H)         hrec_ref(TB, N*I)
         l1_ref   (TB, N)   f32     l2_ref  (TB, N)   f32
    """
    h = h_ref[...]                                              # (TB, N*I) f32

    # Encoder: relu(h @ W_enc_bd + b_eff); the (h - b_dec) centering is folded
    # into b_eff in the wrapper.  f32 accumulation on the MXU.
    pre = jnp.dot(h.astype(we_ref.dtype), we_ref[...],
                  preferred_element_type=jnp.float32)           # (TB, N*H)
    acts = jnp.maximum(pre + be_ref[...], 0.0)
    acts_ref[...] = acts.astype(acts_ref.dtype)

    # Decoder: W_dec rows are pre-normalized (once) in the wrapper.
    rec = jnp.dot(acts.astype(wd_ref.dtype), wd_ref[...],
                  preferred_element_type=jnp.float32) + bd_ref[...]   # (TB, N*I)
    hrec_ref[...] = rec.astype(hrec_ref.dtype)

    # Per-instance reductions as tiny MXU matmuls against 0/1 segment matrices:
    # keeps the kernel fully 2-D (no lane<->sublane reshapes / transposes) and
    # avoids re-reading acts / h_rec from HBM in the wrapper.  l2 uses the
    # original f32 h regardless of the compute dtype.
    diff = rec - h
    l1_ref[...] = jnp.dot(jnp.abs(acts), selh_ref[...],
                          preferred_element_type=jnp.float32).astype(l1_ref.dtype)
    l2_ref[...] = jnp.dot(diff * diff, seli_ref[...],
                          preferred_element_type=jnp.float32).astype(l2_ref.dtype)


def _round_up(x, m):
    return ((int(x) + m - 1) // m) * m


def _padded_bytes(rows, cols, dtype):
    """VMEM footprint of a 2-D tile after (sublane, lane) padding."""
    it = jnp.dtype(dtype).itemsize
    sublane = max(8, 32 // it)                       # 8 for f32, 16 for bf16
    return _round_up(max(int(rows), 1), sublane) * _round_up(max(int(cols), 1), 128) * it


def _vmem_config():
    """Generation-aware VMEM budgets.
       v7x   (64 MiB physical)  -> scoped limit ~48 MiB, pipelined budget ~24 MiB
       v5e/v6e (128 MiB)        -> scoped limit ~96 MiB, pipelined budget ~48 MiB"""
    cap = 64 * 2 ** 20
    try:
        cap = int(pltpu.get_tpu_info().vmem_capacity_bytes)
    except Exception:
        pass
    limit_cap = min((cap * 3) // 4, 112 * 2 ** 20)   # headroom for Mosaic scratch
    budget = limit_cap // 2
    return budget, limit_cap


def _default_compute_dtype():
    """bf16 matmul operands (f32 accumulation) on v6e / v7x; f32 elsewhere."""
    try:
        kind = jax.devices()[0].device_kind.lower()
    except Exception:
        return jnp.float32
    if "v6" in kind or "v7" in kind:
        return jnp.bfloat16
    return jnp.float32


def _step_vmem_bytes(tb, n, ni, nh, w_dtype, acts_dtype, hrec_dtype):
    f32 = jnp.float32
    # Batch-moving blocks: double-buffered by the BlockSpec pipeline.
    moving = 2 * (_padded_bytes(tb, ni, f32)                 # h tile
                  + _padded_bytes(tb, nh, acts_dtype)        # acts tile
                  + _padded_bytes(tb, ni, hrec_dtype)        # h_rec tile
                  + 2 * _padded_bytes(tb, n, f32))           # l1, l2 tiles
    # Constant-index blocks (weights / biases / segment matrices): count both buffers.
    resident = 2 * (_padded_bytes(ni, nh, w_dtype) + _padded_bytes(nh, ni, w_dtype)
                    + _padded_bytes(1, nh, f32) + _padded_bytes(1, ni, f32)
                    + _padded_bytes(nh, n, f32) + _padded_bytes(ni, n, f32))
    # In-kernel f32 temporaries (pre/acts/|acts|, rec/diff/diff^2, casts).
    temps = 3 * _padded_bytes(tb, nh, f32) + 3 * _padded_bytes(tb, ni, f32)
    return moving + resident + temps


def _choose_batch_tile(B, n, ni, nh, w_dtype, acts_dtype, hrec_dtype, budget_bytes,
                       tb_cap=4096):
    tb = min(_round_up(B, 8), tb_cap)
    while tb > 8 and _step_vmem_bytes(tb, n, ni, nh, w_dtype, acts_dtype,
                                      hrec_dtype) > budget_bytes:
        nxt = max(8, _round_up(tb // 2, 8))
        if nxt == tb:
            break
        tb = nxt
    # Prefer >= 4 grid steps (2-TC sharding + pipeline depth) when the batch is
    # big enough, but never shrink tiles below 512 rows (per-step overhead).
    if -(-B // tb) < 4:
        alt = _round_up(-(-B // 4), 8)
        if alt >= 512:
            tb = min(tb, alt)
    return tb, _step_vmem_bytes(tb, n, ni, nh, w_dtype, acts_dtype, hrec_dtype)


def autoencoder_forward(h, W_enc, W_dec, b_enc, b_dec,
                        l1_coeff=L1_COEFF, eps=WEIGHT_NORMALIZE_EPS, *,
                        compute_dtype=None, out_dtype=None, block_batch=None):
    """h: [batch, n_instances, n_input_ae].  Returns the same 5-tuple as
    AutoEncoder.forward (tied_weights=False):
      (l1_loss [B,N], l2_loss [B,N], loss [], acts [B,N,H], h_reconstructed [B,N,I])."""
    B, N, I = h.shape
    H = W_enc.shape[-1]
    NI, NH = N * I, N * H
    f32 = jnp.float32

    w_dtype = jnp.dtype(_default_compute_dtype() if compute_dtype is None else compute_dtype)
    o_dtype = jnp.dtype(h.dtype if out_dtype is None else out_dtype)

    budget, limit_cap = _vmem_config()
    if block_batch is None:
        TB, est = _choose_batch_tile(B, N, NI, NH, w_dtype, o_dtype, o_dtype, budget)
    else:
        TB = int(block_batch)
        est = _step_vmem_bytes(TB, N, NI, NH, w_dtype, o_dtype, o_dtype)
    grid = (pl.cdiv(B, TB),)

    We32 = W_enc.astype(f32)
    Wd32 = W_dec.astype(f32)
    bd32 = b_dec.astype(f32)

    # Decoder row-normalization (module's normalize_and_return_W_dec); tiny, once.
    norm = jnp.sqrt(jnp.sum(jnp.square(Wd32), axis=-1, keepdims=True))
    Wd_n = Wd32 / (norm + eps)

    # Fold the (h - b_dec) centering into an effective encoder bias.
    b_eff = b_enc.astype(f32) - jnp.einsum('ni,nih->nh', bd32, We32)

    # Block-diagonal weights: the per-instance batched matmuls become single
    # lane-dense 2-D MXU matmuls -> no batch-major <-> instance-major transposes.
    eyeN = jnp.eye(N, dtype=f32)
    We_bd = (We32[:, :, None, :] * eyeN[:, None, :, None]).reshape(NI, NH).astype(w_dtype)
    Wd_bd = (Wd_n[:, :, None, :] * eyeN[:, None, :, None]).reshape(NH, NI).astype(w_dtype)

    # Segment-sum / segment-mean matrices for per-instance l1 / l2 reductions.
    sel_h = jnp.repeat(eyeN, H, axis=0)                    # (N*H, N)
    sel_i = jnp.repeat(eyeN, I, axis=0) / float(I)         # (N*I, N)

    h2 = h.astype(f32).reshape(B, NI)                      # contiguous merge (free)
    be_flat = b_eff.reshape(1, NH)
    bd_flat = bd32.reshape(1, NI)

    flops = int(4 * B * NI * NH + 2 * B * (NH + NI) * N + 6 * B * (NH + NI))
    bytes_accessed = int(4 * B * NI                               # h read
                         + w_dtype.itemsize * 2 * NI * NH         # block-diag weights
                         + 4 * (NH + NI) * (N + 1)                # biases + segment mats
                         + o_dtype.itemsize * B * (NH + NI)       # acts + h_rec writes
                         + 4 * 2 * B * N)                         # l1 + l2 writes
    cost = pl.CostEstimate(flops=flops, transcendentals=0, bytes_accessed=bytes_accessed)

    vmem_limit = int(min(max(est + est // 2, 32 * 2 ** 20), limit_cap))

    out_shapes = (
        jax.ShapeDtypeStruct((B, NH), o_dtype),    # acts (instance-major lanes)
        jax.ShapeDtypeStruct((B, NI), o_dtype),    # h_reconstructed
        jax.ShapeDtypeStruct((B, N), f32),         # l1
        jax.ShapeDtypeStruct((B, N), f32),         # l2
    )

    acts2, hrec2, l1_loss, l2_loss = pl.pallas_call(
        _ae_kernel,
        out_shape=out_shapes,
        grid=grid,
        in_specs=[
            pl.BlockSpec((TB, NI), lambda b: (b, 0)),   # h tile (streams with batch)
            pl.BlockSpec((NI, NH), lambda b: (0, 0)),   # W_enc block-diag (resident)
            pl.BlockSpec((NH, NI), lambda b: (0, 0)),   # W_dec block-diag (resident)
            pl.BlockSpec((1, NH), lambda b: (0, 0)),    # effective encoder bias
            pl.BlockSpec((1, NI), lambda b: (0, 0)),    # decoder bias
            pl.BlockSpec((NH, N), lambda b: (0, 0)),    # l1 segment-sum matrix
            pl.BlockSpec((NI, N), lambda b: (0, 0)),    # l2 segment-mean matrix
        ],
        out_specs=(
            pl.BlockSpec((TB, NH), lambda b: (b, 0)),
            pl.BlockSpec((TB, NI), lambda b: (b, 0)),
            pl.BlockSpec((TB, N), lambda b: (b, 0)),
            pl.BlockSpec((TB, N), lambda b: (b, 0)),
        ),
        compiler_params=pltpu.CompilerParams(
            dimension_semantics=("parallel",),
            vmem_limit_bytes=vmem_limit),
        cost_estimate=cost,
    )(h2, We_bd, Wd_bd, be_flat, bd_flat, sel_h, sel_i)

    acts = acts2.reshape(B, N, H)                 # contiguous splits (free)
    h_reconstructed = hrec2.reshape(B, N, I)
    loss = jnp.sum(jnp.mean(l1_coeff * l1_loss + l2_loss, axis=0))
    return l1_loss, l2_loss, loss, acts, h_reconstructed


def _reference_forward(h, W_enc, W_dec, b_enc, b_dec, l1_coeff=L1_COEFF):
    """Pure-JAX reference reproducing the PyTorch forward for verification."""
    h_cent = h - b_dec[None]
    acts = jnp.einsum('bni,nih->bnh', h_cent, W_enc)
    acts = jax.nn.relu(acts + b_enc[None])
    norm = jnp.linalg.norm(W_dec, axis=2, keepdims=True)
    W_dec_n = W_dec / (norm + WEIGHT_NORMALIZE_EPS)
    h_rec = jnp.einsum('bnh,nhi->bni', acts, W_dec_n) + b_dec[None]
    l2_loss = jnp.mean((h_rec - h) ** 2, axis=-1)
    l1_loss = jnp.sum(jnp.abs(acts), axis=-1)
    loss = jnp.sum(jnp.mean(l1_coeff * l1_loss + l2_loss, axis=0))
    return l1_loss, l2_loss, loss, acts, h_rec


def _xavier_normal(key, shape):
    # torch.nn.init.xavier_normal_ for a 3D tensor (n0, n1, n2):
    # fan_in = n1 * n2, fan_out = n0 * n2.
    n0, n1, n2 = shape
    fan_in, fan_out = n1 * n2, n0 * n2
    std = (2.0 / (fan_in + fan_out)) ** 0.5
    return std * jax.random.normal(key, shape, dtype=jnp.float32)


if __name__ == "__main__":
    batch, n_instances, n_input_ae, n_hidden_ae = 8, 4, 16, 32

    key = jax.random.PRNGKey(0)
    k_we, k_wd, k_be, k_bd, k_h = jax.random.split(key, 5)
    W_enc = _xavier_normal(k_we, (n_instances, n_input_ae, n_hidden_ae))
    W_dec = _xavier_normal(k_wd, (n_instances, n_hidden_ae, n_input_ae))
    b_enc = 0.05 * jax.random.normal(k_be, (n_instances, n_hidden_ae), dtype=jnp.float32)
    b_dec = 0.05 * jax.random.normal(k_bd, (n_instances, n_input_ae), dtype=jnp.float32)
    h = jax.random.normal(k_h, (batch, n_instances, n_input_ae), dtype=jnp.float32)

    refs = _reference_forward(h, W_enc, W_dec, b_enc, b_dec)

    # Exact-semantics f32 path: must match the PyTorch-style reference tightly.
    outs = jax.block_until_ready(
        autoencoder_forward(h, W_enc, W_dec, b_enc, b_dec, compute_dtype=jnp.float32))
    for got, want in zip(outs, refs):
        assert got.shape == want.shape, (got.shape, want.shape)
        assert jnp.allclose(got, want, atol=1e-5, rtol=1e-5), "f32 mismatch vs reference"

    # Multi-step grid + ragged batch tail (forced small batch tile).
    B2, N2, I2, H2 = 1000, 2, 8, 64
    k1, k2, k3, k4, k5 = jax.random.split(jax.random.PRNGKey(1), 5)
    W_enc2 = _xavier_normal(k1, (N2, I2, H2))
    W_dec2 = _xavier_normal(k2, (N2, H2, I2))
    b_enc2 = 0.05 * jax.random.normal(k3, (N2, H2), dtype=jnp.float32)
    b_dec2 = 0.05 * jax.random.normal(k4, (N2, I2), dtype=jnp.float32)
    h2_in = jax.random.normal(k5, (B2, N2, I2), dtype=jnp.float32)
    refs2 = _reference_forward(h2_in, W_enc2, W_dec2, b_enc2, b_dec2)
    outs2 = jax.block_until_ready(
        autoencoder_forward(h2_in, W_enc2, W_dec2, b_enc2, b_dec2,
                            compute_dtype=jnp.float32, block_batch=128))
    for got, want in zip(outs2, refs2):
        assert got.shape == want.shape, (got.shape, want.shape)
        assert jnp.allclose(got, want, atol=1e-5, rtol=1e-5), "ragged-grid mismatch"

    # Hardware-default path (bf16 matmul operands on v6e / v7x): loose tolerance.
    outs_def = jax.block_until_ready(autoencoder_forward(h, W_enc, W_dec, b_enc, b_dec))
    for got, want in zip(outs_def, refs):
        assert jnp.allclose(got, want, atol=5e-2, rtol=5e-2), "default-path mismatch"

    l1_loss, l2_loss, loss, acts, h_rec = outs
    assert l1_loss.shape == (batch, n_instances)
    assert l2_loss.shape == (batch, n_instances)
    assert loss.shape == ()
    assert acts.shape == (batch, n_instances, n_hidden_ae)
    assert h_rec.shape == (batch, n_instances, n_input_ae)

    print("KERNEL_OK")
</pallas_src>

<mosaic_0001>
module attributes {stable_mosaic.version = 11 : i64} {
  func.func @_ae_kernel(%arg0: i32, %arg1: memref<8x64xf32, #tpu.memory_space<vmem>>, %arg2: memref<64x128xf32, #tpu.memory_space<vmem>>, %arg3: memref<128x64xf32, #tpu.memory_space<vmem>>, %arg4: memref<1x128xf32, #tpu.memory_space<vmem>>, %arg5: memref<1x64xf32, #tpu.memory_space<vmem>>, %arg6: memref<128x4xf32, #tpu.memory_space<vmem>>, %arg7: memref<64x4xf32, #tpu.memory_space<vmem>>, %arg8: memref<8x128xf32, #tpu.memory_space<vmem>>, %arg9: memref<8x64xf32, #tpu.memory_space<vmem>>, %arg10: memref<8x4xf32, #tpu.memory_space<vmem>>, %arg11: memref<8x4xf32, #tpu.memory_space<vmem>>) attributes {dimension_semantics = [#tpu.dimension_semantics<parallel>], iteration_bounds = array<i64: 1>, scalar_prefetch = 0 : i64, scratch_operands = 0 : i64, tpu.core_type = #tpu.core_type<tc>, window_params = [{transform_indices = @transform_0, window_bounds = array<i64: 8, 64>}, {pipeline_mode = #tpu.pipeline_mode<synchronous>, transform_indices = @transform_1, window_bounds = array<i64: 64, 128>}, {pipeline_mode = #tpu.pipeline_mode<synchronous>, transform_indices = @transform_2, window_bounds = array<i64: 128, 64>}, {pipeline_mode = #tpu.pipeline_mode<synchronous>, transform_indices = @transform_3, window_bounds = array<i64: 1, 128>}, {pipeline_mode = #tpu.pipeline_mode<synchronous>, transform_indices = @transform_4, window_bounds = array<i64: 1, 64>}, {pipeline_mode = #tpu.pipeline_mode<synchronous>, transform_indices = @transform_5, window_bounds = array<i64: 128, 4>}, {pipeline_mode = #tpu.pipeline_mode<synchronous>, transform_indices = @transform_6, window_bounds = array<i64: 64, 4>}, {transform_indices = @transform_7, window_bounds = array<i64: 8, 128>}, {transform_indices = @transform_8, window_bounds = array<i64: 8, 64>}, {transform_indices = @transform_9, window_bounds = array<i64: 8, 4>}, {transform_indices = @transform_10, window_bounds = array<i64: 8, 4>}]} {
    %c0 = arith.constant 0 : index
    %c0_0 = arith.constant 0 : index
    %0 = vector.load %arg1[%c0, %c0_0] : memref<8x64xf32, #tpu.memory_space<vmem>>, vector<8x64xf32>
    %c0_1 = arith.constant 0 : index
    %c0_2 = arith.constant 0 : index
    %1 = vector.load %arg2[%c0_1, %c0_2] : memref<64x128xf32, #tpu.memory_space<vmem>>, vector<64x128xf32>
    %cst = arith.constant dense<0.000000e+00> : vector<8x128xf32>
    %2 = tpu.matmul %0, %1, %cst {dimension_numbers = #tpu.dot_dimension_numbers<[1], [0], [0], [1], [0, 0, 1, 1], [], []>} : vector<8x64xf32>, vector<64x128xf32>, vector<8x128xf32> -> vector<8x128xf32>
    %c0_3 = arith.constant 0 : index
    %c0_4 = arith.constant 0 : index
    %3 = vector.load %arg4[%c0_3, %c0_4] : memref<1x128xf32, #tpu.memory_space<vmem>>, vector<1x128xf32>
    %4 = vector.broadcast %3 : vector<1x128xf32> to vector<8x128xf32>
    %5 = arith.addf %2, %4 : vector<8x128xf32>
    %cst_5 = arith.constant 0.000000e+00 : f32
    %6 = vector.broadcast %cst_5 : f32 to vector<8x128xf32>
    %7 = arith.maximumf %5, %6 : vector<8x128xf32>
    %c0_6 = arith.constant 0 : index
    %c0_7 = arith.constant 0 : index
    %8 = vector.load %arg8[%c0_6, %c0_7] : memref<8x128xf32, #tpu.memory_space<vmem>>, vector<8x128xf32>
    tpu.vector_store %arg8[%c0_6, %c0_7], %7 {strides = array<i32>} : memref<8x128xf32, #tpu.memory_space<vmem>>, vector<8x128xf32>,
    %c0_8 = arith.constant 0 : index
    %c0_9 = arith.constant 0 : index
    %9 = vector.load %arg3[%c0_8, %c0_9] : memref<128x64xf32, #tpu.memory_space<vmem>>, vector<128x64xf32>
    %cst_10 = arith.constant dense<0.000000e+00> : vector<8x64xf32>
    %10 = tpu.matmul %7, %9, %cst_10 {dimension_numbers = #tpu.dot_dimension_numbers<[1], [0], [0], [1], [0, 0, 1, 1], [], []>} : vector<8x128xf32>, vector<128x64xf32>, vector<8x64xf32> -> vector<8x64xf32>
    %c0_11 = arith.constant 0 : index
    %c0_12 = arith.constant 0 : index
    %11 = vector.load %arg5[%c0_11, %c0_12] : memref<1x64xf32, #tpu.memory_space<vmem>>, vector<1x64xf32>
    %12 = vector.broadcast %11 : vector<1x64xf32> to vector<8x64xf32>
    %13 = arith.addf %10, %12 : vector<8x64xf32>
    %c0_13 = arith.constant 0 : index
    %c0_14 = arith.constant 0 : index
    %14 = vector.load %arg9[%c0_13, %c0_14] : memref<8x64xf32, #tpu.memory_space<vmem>>, vector<8x64xf32>
    tpu.vector_store %arg9[%c0_13, %c0_14], %13 {strides = array<i32>} : memref<8x64xf32, #tpu.memory_space<vmem>>, vector<8x64xf32>,
    %15 = arith.subf %13, %0 : vector<8x64xf32>
    %16 = math.absf %7 : vector<8x128xf32>
    %c0_15 = arith.constant 0 : index
    %c0_16 = arith.constant 0 : index
    %17 = vector.load %arg6[%c0_15, %c0_16] : memref<128x4xf32, #tpu.memory_space<vmem>>, vector<128x4xf32>
    %cst_17 = arith.constant dense<0.000000e+00> : vector<8x4xf32>
    %18 = tpu.matmul %16, %17, %cst_17 {dimension_numbers = #tpu.dot_dimension_numbers<[1], [0], [0], [1], [0, 0, 1, 1], [], []>} : vector<8x128xf32>, vector<128x4xf32>, vector<8x4xf32> -> vector<8x4xf32>
    %c0_18 = arith.constant 0 : index
    %c0_19 = arith.constant 0 : index
    %19 = vector.load %arg10[%c0_18, %c0_19] : memref<8x4xf32, #tpu.memory_space<vmem>>, vector<8x4xf32>
    tpu.vector_store %arg10[%c0_18, %c0_19], %18 {strides = array<i32>} : memref<8x4xf32, #tpu.memory_space<vmem>>, vector<8x4xf32>,
    %20 = arith.mulf %15, %15 : vector<8x64xf32>
    %c0_20 = arith.constant 0 : index
    %c0_21 = arith.constant 0 : index
    %21 = vector.load %arg7[%c0_20, %c0_21] : memref<64x4xf32, #tpu.memory_space<vmem>>, vector<64x4xf32>
    %cst_22 = arith.constant dense<0.000000e+00> : vector<8x4xf32>
    %22 = tpu.matmul %20, %21, %cst_22 {dimension_numbers = #tpu.dot_dimension_numbers<[1], [0], [0], [1], [0, 0, 1, 1], [], []>} : vector<8x64xf32>, vector<64x4xf32>, vector<8x4xf32> -> vector<8x4xf32>
    %c0_23 = arith.constant 0 : index
    %c0_24 = arith.constant 0 : index
    %23 = vector.load %arg11[%c0_23, %c0_24] : memref<8x4xf32, #tpu.memory_space<vmem>>, vector<8x4xf32>
    tpu.vector_store %arg11[%c0_23, %c0_24], %22 {strides = array<i32>} : memref<8x4xf32, #tpu.memory_space<vmem>>, vector<8x4xf32>,
    return
  }
  func.func @transform_0(%arg0: i32) -> (i32, i32) {
    %c0_i32 = arith.constant 0 : i32
    %c0_i32_0 = arith.constant 0 : i32
    return %arg0, %c0_i32 : i32, i32
  }
  func.func @transform_1(%arg0: i32) -> (i32, i32) {
    %c0_i32 = arith.constant 0 : i32
    %c0_i32_0 = arith.constant 0 : i32
    %c0_i32_1 = arith.constant 0 : i32
    return %c0_i32, %c0_i32_0 : i32, i32
  }
  func.func @transform_2(%arg0: i32) -> (i32, i32) {
    %c0_i32 = arith.constant 0 : i32
    %c0_i32_0 = arith.constant 0 : i32
    %c0_i32_1 = arith.constant 0 : i32
    return %c0_i32, %c0_i32_0 : i32, i32
  }
  func.func @transform_3(%arg0: i32) -> (i32, i32) {
    %c0_i32 = arith.constant 0 : i32
    %c0_i32_0 = arith.constant 0 : i32
    %c0_i32_1 = arith.constant 0 : i32
    return %c0_i32, %c0_i32_0 : i32, i32
  }
  func.func @transform_4(%arg0: i32) -> (i32, i32) {
    %c0_i32 = arith.constant 0 : i32
    %c0_i32_0 = arith.constant 0 : i32
    %c0_i32_1 = arith.constant 0 : i32
    return %c0_i32, %c0_i32_0 : i32, i32
  }
  func.func @transform_5(%arg0: i32) -> (i32, i32) {
    %c0_i32 = arith.constant 0 : i32
    %c0_i32_0 = arith.constant 0 : i32
    %c0_i32_1 = arith.constant 0 : i32
    return %c0_i32, %c0_i32_0 : i32, i32
  }
  func.func @transform_6(%arg0: i32) -> (i32, i32) {
    %c0_i32 = arith.constant 0 : i32
    %c0_i32_0 = arith.constant 0 : i32
    %c0_i32_1 = arith.constant 0 : i32
    return %c0_i32, %c0_i32_0 : i32, i32
  }
  func.func @transform_7(%arg0: i32) -> (i32, i32) {
    %c0_i32 = arith.constant 0 : i32
    %c0_i32_0 = arith.constant 0 : i32
    return %arg0, %c0_i32 : i32, i32
  }
  func.func @transform_8(%arg0: i32) -> (i32, i32) {
    %c0_i32 = arith.constant 0 : i32
    %c0_i32_0 = arith.constant 0 : i32
    return %arg0, %c0_i32 : i32, i32
  }
  func.func @transform_9(%arg0: i32) -> (i32, i32) {
    %c0_i32 = arith.constant 0 : i32
    %c0_i32_0 = arith.constant 0 : i32
    return %arg0, %c0_i32 : i32, i32
  }
  func.func @transform_10(%arg0: i32) -> (i32, i32) {
    %c0_i32 = arith.constant 0 : i32
    %c0_i32_0 = arith.constant 0 : i32
    return %arg0, %c0_i32 : i32, i32
  }
}

</mosaic_0001>

<llo_original>
// kernel: tpu_custom_call.1
$region0: #{tpu_custom_call.1}
  #allocation0 [shape = 'u32[]', space=smem, size = 0x4, offset = 0x4, fixed_abs, tag = 'smem constant byte address 0x4 - core index']
  #allocation1 [shape = 'u32[144,128]{1,0:T(1,128)}', space=vmem, size = 0x12000, scoped, tag = 'internal scratch']
  %s0 = inlined_call_operand.vmem [shape: f32[8,64], index: 0, kind: input, shape index: {}]
  %s1 = inlined_call_operand.vmem [shape: f32[64,128], index: 1, kind: input, shape index: {}]
  %s2 = inlined_call_operand.vmem [shape: f32[128,64], index: 2, kind: input, shape index: {}]
  %s3 = inlined_call_operand.vmem [shape: f32[1,128], index: 3, kind: input, shape index: {}]
  %s4 = inlined_call_operand.vmem [shape: f32[1,64], index: 4, kind: input, shape index: {}]
  %s5 = inlined_call_operand.vmem [shape: f32[128,4], index: 5, kind: input, shape index: {}]
  %s6 = inlined_call_operand.vmem [shape: f32[64,4], index: 6, kind: input, shape index: {}]
  %s7 = inlined_call_operand.hbm [shape: f32[8,128], index: 7, kind: output, shape index: {0}]
  %s8 = inlined_call_operand.hbm [shape: f32[8,64], index: 8, kind: output, shape index: {1}]
  %s9 = inlined_call_operand.vmem [shape: f32[8,4], index: 9, kind: output, shape index: {2}]
  %s10 = inlined_call_operand.vmem [shape: f32[8,4], index: 10, kind: output, shape index: {3}]
  %11 = xla_tuple %s7, %s8, %s9, %s10
  %s12 = sld [smem:[#allocation0]]
  $region62: #{tpu_custom_call.1} parent=0
    _
  %s14 = ssub.s32 1, %s12
  %s15 = scalar_select 0, %s14, %s12
  $region1: #{tpu_custom_call.1} parent=0
    #allocation2 [shape = 'u8[4096]{0}', space=vmem, size = 0x1000, scoped, tag = 'output window, operand 0, single buffered']
    #allocation3 [shape = 's32[1]{0}', space=sflag, size = 0x4, scoped, tag = 'scoped memory for tpu_custom_call.1']
    #allocation4 [shape = 'u8[4096]{0}', space=vmem, size = 0x1000, scoped, tag = 'output window, operand 1, single buffered']
    #allocation5 [shape = 's32[1]{0}', space=sflag, size = 0x4, scoped, tag = 'scoped memory for tpu_custom_call.1']
    %16 = vsyncpa [#allocation3], 0
    %17 = vsyncpa [#allocation5], 0
    // Predicated region
    $region2: #{tpu_custom_call.1} parent=1 // pred_check
      _
    $region3: #{tpu_custom_call.1} parent=1 // pred_check_branch
      %19 = sbr.rel (0) target = $region5
    $region4: #{tpu_custom_call.1} parent=1 // pred_region
      _
    $region5: #{tpu_custom_call.1} parent=1 // pred_fallthru
      _
    // Predicated region
    $region6: #{tpu_custom_call.1} parent=1 // pred_check
      _
    $region7: #{tpu_custom_call.1} parent=1 // pred_check_branch
      %21 = sbr.rel (0) target = $region9
    $region8: #{tpu_custom_call.1} parent=1 // pred_region
      _
    $region9: #{tpu_custom_call.1} parent=1 // pred_fallthru
      _
    // Predicated region
    $region10: #{tpu_custom_call.1} parent=1 // pred_check
      _
    $region11: #{tpu_custom_call.1} parent=1 // pred_check_branch
      %23 = sbr.rel (0) target = $region13
    $region12: #{tpu_custom_call.1} parent=1 // pred_region
      _
    $region13: #{tpu_custom_call.1} parent=1 // pred_fallthru
      _
    // Predicated region
    $region14: #{tpu_custom_call.1} parent=1 // pred_check
      _
    $region15: #{tpu_custom_call.1} parent=1 // pred_check_branch
      %25 = sbr.rel (0) target = $region17
    $region16: #{tpu_custom_call.1} parent=1 // pred_region
      _
    $region17: #{tpu_custom_call.1} parent=1 // pred_fallthru
      _
    // Predicated region
    $region18: #{tpu_custom_call.1} parent=1 // pred_check
      _
    $region19: #{tpu_custom_call.1} parent=1 // pred_check_branch
      %27 = sbr.rel (0) target = $region21
    $region20: #{tpu_custom_call.1} parent=1 // pred_region
      _
    $region21: #{tpu_custom_call.1} parent=1 // pred_fallthru
      _
    // Predicated region
    $region22: #{tpu_custom_call.1} parent=1 // pred_check
      _
    $region23: #{tpu_custom_call.1} parent=1 // pred_check_branch
      %29 = sbr.rel (0) target = $region25
    $region24: #{tpu_custom_call.1} parent=1 // pred_region
      _
    $region25: #{tpu_custom_call.1} parent=1 // pred_fallthru
      _
    // Predicated region
    $region26: #{tpu_custom_call.1} parent=1 // pred_check
      _
    $region27: #{tpu_custom_call.1} parent=1 // pred_check_branch
      %31 = sbr.rel (0) target = $region29
    $region28: #{tpu_custom_call.1} parent=1 // pred_region
      _
    $region29: #{tpu_custom_call.1} parent=1 // pred_fallthru
      _
    %v32 = vld [vmem:[%s0] sm:$0xff]
    %v33 = vld [vmem:[%s1] sm:$0xff]
    %v34 = vld [vmem:[%s1 + $0x8] sm:$0xff]
    %v35 = vld [vmem:[%s1 + $0x10] sm:$0xff]
    %v36 = vld [vmem:[%s1 + $0x18] sm:$0xff]
    %v37 = vld [vmem:[%s1 + $0x20] sm:$0xff]
    %v38 = vld [vmem:[%s1 + $0x28] sm:$0xff]
    %v39 = vld [vmem:[%s1 + $0x30] sm:$0xff]
    %v40 = vld [vmem:[%s1 + $0x38] sm:$0xff]
    %v41 = vld [vmem:[%s3] sm:$0x1]
    %v43 = vlaneseq
    %v44 = vshrl.u32 %v43, 7
    %v45 = vsub.s32 0, %v44
    %v46 = vrot.slane %v41, %v45
    %vm48 = vcmask 523264
    %v50 = vsel %vm48, %v32, 0
    %52 = vmatprep.subr.mxu0 0.0
    %53 = vmatpush1.msra.mxu0 %v33
    %54 = vmatprep.subr.mxu0 0.0
    %55 = vmatpush1.msra.mxu0 %v34
    %56 = vmatprep.subr.mxu0 0.0
    %57 = vmatpush1.msra.mxu0 %v35
    %58 = vmatprep.subr.mxu0 0.0
    %59 = vmatpush1.msra.mxu0 %v36
    %60 = vmatprep.subr.mxu0 0.0
    %61 = vmatpush1.msra.mxu0 %v37
    %62 = vmatprep.subr.mxu0 0.0
    %63 = vmatpush1.msra.mxu0 %v38
    %64 = vmatprep.subr.mxu0 0.0
    %65 = vmatpush1.msra.mxu0 %v39
    %66 = vmatprep.subr.mxu0 0.0
    %67 = vmatpush1.msra.mxu0 %v40
    %68 = vmatprep.subr.mxu0 0.0
    %69 = vmatpush1.msra.mxu0 0.0
    %70 = vmatprep.subr.mxu0 0.0
    %71 = vmatpush1.msra.mxu0 0.0
    %72 = vmatprep.subr.mxu0 0.0
    %73 = vmatpush1.msra.mxu0 0.0
    %74 = vmatprep.subr.mxu0 0.0
    %75 = vmatpush1.msra.mxu0 0.0
    %76 = vmatprep.subr.mxu0 0.0
    %77 = vmatpush1.msra.mxu0 0.0
    %78 = vmatprep.subr.mxu0 0.0
    %79 = vmatpush1.msra.mxu0 0.0
    %80 = vmatprep.subr.mxu0 0.0
    %81 = vmatpush1.msra.mxu0 0.0
    %82 = vmatprep.subr.mxu0 0.0
    %83 = vmatpush1.msra.mxu0 0.0
    %84 = vmatprep.subr.mxu0 0.0
    %85 = vmatpush1.msra.mxu0 0.0
    %86 = vmatprep.subr.mxu0 0.0
    %87 = vmatpush1.msra.mxu0 0.0
    %88 = vmatprep.subr.mxu0 0.0
    %89 = vmatpush1.msra.mxu0 0.0
    %90 = vmatprep.subr.mxu0 0.0
    %91 = vmatpush1.msra.mxu0 0.0
    %92 = vmatprep.subr.mxu0 0.0
    %93 = vmatpush1.msra.mxu0 0.0
    %94 = vmatprep.subr.mxu0 0.0
    %95 = vmatpush1.msra.mxu0 0.0
    %96 = vmatprep.subr.mxu0 0.0
    %97 = vmatpush1.msra.mxu0 0.0
    %98 = vmatprep.subr.mxu0 0.0
    %99 = vmatpush1.msra.mxu0 0.0
    %100 = vmatprep.subr.mxu0 0.0
    %101 = vmatpush1.msra.mxu0 0.0
    %102 = vmatprep.subr.mxu0 0.0
    %103 = vmatpush1.msra.mxu0 0.0
    %104 = vmatprep.subr.mxu0 0.0
    %105 = vmatpush1.msra.mxu0 0.0
    %106 = vmatprep.subr.mxu0 0.0
    %107 = vmatpush1.msra.mxu0 0.0
    %108 = vmatprep.subr.mxu0 0.0
    %109 = vmatpush1.msra.mxu0 0.0
    %110 = vmatprep.subr.mxu0 0.0
    %111 = vmatpush1.msra.mxu0 0.0
    %112 = vmatprep.subr.mxu0 0.0
    %113 = vmatpush1.msra.mxu0 0.0
    %114 = vmatprep.subr.mxu0 0.0
    %115 = vmatpush1.msra.mxu0 0.0
    %116 = vmatprep.mubr.f32.mxu0 0.0
    %117 = vmatmul.mubr.f32.gmra.mrb[0].mxu0 %v50
    %v118 = vpop.f32.mrb[0].mxu0
    %v119 = vadd.f32 %v46, %v118
    %v120 = vpop.f32.mrb[0].mxu0
    %121 = vdwg.mxu0
    %v122 = vmax.f32 %v119, 0.0
    %123 = vst [vmem:[#allocation2] sm:$0xff] %v122
    %v124 = vld [vmem:[%s2] sm:$0xff]
    %v125 = vld [vmem:[%s2 + $0x8] sm:$0xff]
    %v126 = vld [vmem:[%s2 + $0x10] sm:$0xff]
    %v127 = vld [vmem:[%s2 + $0x18] sm:$0xff]
    %v128 = vld [vmem:[%s2 + $0x20] sm:$0xff]
    %v129 = vld [vmem:[%s2 + $0x28] sm:$0xff]
    %v130 = vld [vmem:[%s2 + $0x30] sm:$0xff]
    %v131 = vld [vmem:[%s2 + $0x38] sm:$0xff]
    %v132 = vld [vmem:[%s2 + $0x40] sm:$0xff]
    %v133 = vld [vmem:[%s2 + $0x48] sm:$0xff]
    %v134 = vld [vmem:[%s2 + $0x50] sm:$0xff]
    %v135 = vld [vmem:[%s2 + $0x58] sm:$0xff]
    %v136 = vld [vmem:[%s2 + $0x60] sm:$0xff]
    %v137 = vld [vmem:[%s2 + $0x68] sm:$0xff]
    %v138 = vld [vmem:[%s2 + $0x70] sm:$0xff]
    %v139 = vld [vmem:[%s2 + $0x78] sm:$0xff]
    %v140 = vld [vmem:[%s4] sm:$0x1]
    %v142 = vlaneseq
    %v143 = vshrl.u32 %v142, 7
    %v144 = vsub.s32 0, %v143
    %v145 = vrot.slane %v140, %v144
    %147 = vmatprep.subr.mxu0 0.0
    %148 = vmatpush1.msra.mxu0 %v124
    %149 = vmatprep.subr.mxu0 0.0
    %150 = vmatpush1.msra.mxu0 %v125
    %151 = vmatprep.subr.mxu0 0.0
    %152 = vmatpush1.msra.mxu0 %v126
    %153 = vmatprep.subr.mxu0 0.0
    %154 = vmatpush1.msra.mxu0 %v127
    %155 = vmatprep.subr.mxu0 0.0
    %156 = vmatpush1.msra.mxu0 %v128
    %157 = vmatprep.subr.mxu0 0.0
    %158 = vmatpush1.msra.mxu0 %v129
    %159 = vmatprep.subr.mxu0 0.0
    %160 = vmatpush1.msra.mxu0 %v130
    %161 = vmatprep.subr.mxu0 0.0
    %162 = vmatpush1.msra.mxu0 %v131
    %163 = vmatprep.subr.mxu0 0.0
    %164 = vmatpush1.msra.mxu0 %v132
    %165 = vmatprep.subr.mxu0 0.0
    %166 = vmatpush1.msra.mxu0 %v133
    %167 = vmatprep.subr.mxu0 0.0
    %168 = vmatpush1.msra.mxu0 %v134
    %169 = vmatprep.subr.mxu0 0.0
    %170 = vmatpush1.msra.mxu0 %v135
    %171 = vmatprep.subr.mxu0 0.0
    %172 = vmatpush1.msra.mxu0 %v136
    %173 = vmatprep.subr.mxu0 0.0
    %174 = vmatpush1.msra.mxu0 %v137
    %175 = vmatprep.subr.mxu0 0.0
    %176 = vmatpush1.msra.mxu0 %v138
    %177 = vmatprep.subr.mxu0 0.0
    %178 = vmatpush1.msra.mxu0 %v139
    %179 = vmatprep.subr.mxu0 0.0
    %180 = vmatpush1.msra.mxu0 0.0
    %181 = vmatprep.subr.mxu0 0.0
    %182 = vmatpush1.msra.mxu0 0.0
    %183 = vmatprep.subr.mxu0 0.0
    %184 = vmatpush1.msra.mxu0 0.0
    %185 = vmatprep.subr.mxu0 0.0
    %186 = vmatpush1.msra.mxu0 0.0
    %187 = vmatprep.subr.mxu0 0.0
    %188 = vmatpush1.msra.mxu0 0.0
    %189 = vmatprep.subr.mxu0 0.0
    %190 = vmatpush1.msra.mxu0 0.0
    %191 = vmatprep.subr.mxu0 0.0
    %192 = vmatpush1.msra.mxu0 0.0
    %193 = vmatprep.subr.mxu0 0.0
    %194 = vmatpush1.msra.mxu0 0.0
    %195 = vmatprep.subr.mxu0 0.0
    %196 = vmatpush1.msra.mxu0 0.0
    %197 = vmatprep.subr.mxu0 0.0
    %198 = vmatpush1.msra.mxu0 0.0
    %199 = vmatprep.subr.mxu0 0.0
    %200 = vmatpush1.msra.mxu0 0.0
    %201 = vmatprep.subr.mxu0 0.0
    %202 = vmatpush1.msra.mxu0 0.0
    %203 = vmatprep.subr.mxu0 0.0
    %204 = vmatpush1.msra.mxu0 0.0
    %205 = vmatprep.subr.mxu0 0.0
    %206 = vmatpush1.msra.mxu0 0.0
    %207 = vmatprep.subr.mxu0 0.0
    %208 = vmatpush1.msra.mxu0 0.0
    %209 = vmatprep.subr.mxu0 0.0
    %210 = vmatpush1.msra.mxu0 0.0
    %211 = vmatprep.mubr.f32.mxu0 0.0
    %212 = vmatmul.mubr.f32.gmra.mrb[0].mxu0 %v122
    %v213 = vpop.f32.mrb[0].mxu0
    %v214 = vadd.f32 %v145, %v213
    %v215 = vpop.f32.mrb[0].mxu0
    %216 = vdwg.mxu0
    %217 = vst.msk [vmem:[#allocation4] sm:$0xff] %vm48, %v214
    %v218 = vsub.f32 %v214, %v32
    %v219 = vand.u32 2147483647, %v122
    %v220 = vld [vmem:[%s5] sm:$0xff]
    %v221 = vld [vmem:[%s5 + $0x8] sm:$0xff]
    %v222 = vld [vmem:[%s5 + $0x10] sm:$0xff]
    %v223 = vld [vmem:[%s5 + $0x18] sm:$0xff]
    %v224 = vld [vmem:[%s5 + $0x20] sm:$0xff]
    %v225 = vld [vmem:[%s5 + $0x28] sm:$0xff]
    %v226 = vld [vmem:[%s5 + $0x30] sm:$0xff]
    %v227 = vld [vmem:[%s5 + $0x38] sm:$0xff]
    %v228 = vld [vmem:[%s5 + $0x40] sm:$0xff]
    %v229 = vld [vmem:[%s5 + $0x48] sm:$0xff]
    %v230 = vld [vmem:[%s5 + $0x50] sm:$0xff]
    %v231 = vld [vmem:[%s5 + $0x58] sm:$0xff]
    %v232 = vld [vmem:[%s5 + $0x60] sm:$0xff]
    %v233 = vld [vmem:[%s5 + $0x68] sm:$0xff]
    %v234 = vld [vmem:[%s5 + $0x70] sm:$0xff]
    %v235 = vld [vmem:[%s5 + $0x78] sm:$0xff]
    %236 = vmatprep.subr.mxu0 0.0
    %237 = vmatpush1.msra.mxu0 %v220
    %238 = vmatprep.subr.mxu0 0.0
    %239 = vmatpush1.msra.mxu0 %v221
    %240 = vmatprep.subr.mxu0 0.0
    %241 = vmatpush1.msra.mxu0 %v222
    %242 = vmatprep.subr.mxu0 0.0
    %243 = vmatpush1.msra.mxu0 %v223
    %244 = vmatprep.subr.mxu0 0.0
    %245 = vmatpush1.msra.mxu0 %v224
    %246 = vmatprep.subr.mxu0 0.0
    %247 = vmatpush1.msra.mxu0 %v225
    %248 = vmatprep.subr.mxu0 0.0
    %249 = vmatpush1.msra.mxu0 %v226
    %250 = vmatprep.subr.mxu0 0.0
    %251 = vmatpush1.msra.mxu0 %v227
    %252 = vmatprep.subr.mxu0 0.0
    %253 = vmatpush1.msra.mxu0 %v228
    %254 = vmatprep.subr.mxu0 0.0
    %255 = vmatpush1.msra.mxu0 %v229
    %256 = vmatprep.subr.mxu0 0.0
    %257 = vmatpush1.msra.mxu0 %v230
    %258 = vmatprep.subr.mxu0 0.0
    %259 = vmatpush1.msra.mxu0 %v231
    %260 = vmatprep.subr.mxu0 0.0
    %261 = vmatpush1.msra.mxu0 %v232
    %262 = vmatprep.subr.mxu0 0.0
    %263 = vmatpush1.msra.mxu0 %v233
    %264 = vmatprep.subr.mxu0 0.0
    %265 = vmatpush1.msra.mxu0 %v234
    %266 = vmatprep.subr.mxu0 0.0
    %267 = vmatpush1.msra.mxu0 %v235
    %268 = vmatprep.subr.mxu0 0.0
    %269 = vmatpush1.msra.mxu0 0.0
    %270 = vmatprep.subr.mxu0 0.0
    %271 = vmatpush1.msra.mxu0 0.0
    %272 = vmatprep.subr.mxu0 0.0
    %273 = vmatpush1.msra.mxu0 0.0
    %274 = vmatprep.subr.mxu0 0.0
    %275 = vmatpush1.msra.mxu0 0.0
    %276 = vmatprep.subr.mxu0 0.0
    %277 = vmatpush1.msra.mxu0 0.0
    %278 = vmatprep.subr.mxu0 0.0
    %279 = vmatpush1.msra.mxu0 0.0
    %280 = vmatprep.subr.mxu0 0.0
    %281 = vmatpush1.msra.mxu0 0.0
    %282 = vmatprep.subr.mxu0 0.0
    %283 = vmatpush1.msra.mxu0 0.0
    %284 = vmatprep.subr.mxu0 0.0
    %285 = vmatpush1.msra.mxu0 0.0
    %286 = vmatprep.subr.mxu0 0.0
    %287 = vmatpush1.msra.mxu0 0.0
    %288 = vmatprep.subr.mxu0 0.0
    %289 = vmatpush1.msra.mxu0 0.0
    %290 = vmatprep.subr.mxu0 0.0
    %291 = vmatpush1.msra.mxu0 0.0
    %292 = vmatprep.subr.mxu0 0.0
    %293 = vmatpush1.msra.mxu0 0.0
    %294 = vmatprep.subr.mxu0 0.0
    %295 = vmatpush1.msra.mxu0 0.0
    %296 = vmatprep.subr.mxu0 0.0
    %297 = vmatpush1.msra.mxu0 0.0
    %298 = vmatprep.subr.mxu0 0.0
    %299 = vmatpush1.msra.mxu0 0.0
    %300 = vmatprep.mubr.f32.mxu0 0.0
    %301 = vmatmul.mubr.f32.gmra.mrb[0].mxu0 %v219
    %v302 = vpop.f32.mrb[0].mxu0
    %v303 = vadd.f32 0.0, %v302
    %v304 = vpop.f32.mrb[0].mxu0
    %305 = vdwg.mxu0
    %vm306 = vcmask 31744
    %307 = vst.msk [vmem:[%s9] sm:$0xff] %vm306, %v303
    %v308 = vmul.f32 %v218, %v218
    %v309 = vld [vmem:[%s6] sm:$0xff]
    %v310 = vld [vmem:[%s6 + $0x8] sm:$0xff]
    %v311 = vld [vmem:[%s6 + $0x10] sm:$0xff]
    %v312 = vld [vmem:[%s6 + $0x18] sm:$0xff]
    %v313 = vld [vmem:[%s6 + $0x20] sm:$0xff]
    %v314 = vld [vmem:[%s6 + $0x28] sm:$0xff]
    %v315 = vld [vmem:[%s6 + $0x30] sm:$0xff]
    %v316 = vld [vmem:[%s6 + $0x38] sm:$0xff]
    %v318 = vsel %vm48, %v308, 0
    %320 = vmatprep.subr.mxu0 0.0
    %321 = vmatpush1.msra.mxu0 %v309
    %322 = vmatprep.subr.mxu0 0.0
    %323 = vmatpush1.msra.mxu0 %v310
    %324 = vmatprep.subr.mxu0 0.0
    %325 = vmatpush1.msra.mxu0 %v311
    %326 = vmatprep.subr.mxu0 0.0
    %327 = vmatpush1.msra.mxu0 %v312
    %328 = vmatprep.subr.mxu0 0.0
    %329 = vmatpush1.msra.mxu0 %v313
    %330 = vmatprep.subr.mxu0 0.0
    %331 = vmatpush1.msra.mxu0 %v314
    %332 = vmatprep.subr.mxu0 0.0
    %333 = vmatpush1.msra.mxu0 %v315
    %334 = vmatprep.subr.mxu0 0.0
    %335 = vmatpush1.msra.mxu0 %v316
    %336 = vmatprep.subr.mxu0 0.0
    %337 = vmatpush1.msra.mxu0 0.0
    %338 = vmatprep.subr.mxu0 0.0
    %339 = vmatpush1.msra.mxu0 0.0
    %340 = vmatprep.subr.mxu0 0.0
    %341 = vmatpush1.msra.mxu0 0.0
    %342 = vmatprep.subr.mxu0 0.0
    %343 = vmatpush1.msra.mxu0 0.0
    %344 = vmatprep.subr.mxu0 0.0
    %345 = vmatpush1.msra.mxu0 0.0
    %346 = vmatprep.subr.mxu0 0.0
    %347 = vmatpush1.msra.mxu0 0.0
    %348 = vmatprep.subr.mxu0 0.0
    %349 = vmatpush1.msra.mxu0 0.0
    %350 = vmatprep.subr.mxu0 0.0
    %351 = vmatpush1.msra.mxu0 0.0
    %352 = vmatprep.subr.mxu0 0.0
    %353 = vmatpush1.msra.mxu0 0.0
    %354 = vmatprep.subr.mxu0 0.0
    %355 = vmatpush1.msra.mxu0 0.0
    %356 = vmatprep.subr.mxu0 0.0
    %357 = vmatpush1.msra.mxu0 0.0
    %358 = vmatprep.subr.mxu0 0.0
    %359 = vmatpush1.msra.mxu0 0.0
    %360 = vmatprep.subr.mxu0 0.0
    %361 = vmatpush1.msra.mxu0 0.0
    %362 = vmatprep.subr.mxu0 0.0
    %363 = vmatpush1.msra.mxu0 0.0
    %364 = vmatprep.subr.mxu0 0.0
    %365 = vmatpush1.msra.mxu0 0.0
    %366 = vmatprep.subr.mxu0 0.0
    %367 = vmatpush1.msra.mxu0 0.0
    %368 = vmatprep.subr.mxu0 0.0
    %369 = vmatpush1.msra.mxu0 0.0
    %370 = vmatprep.subr.mxu0 0.0
    %371 = vmatpush1.msra.mxu0 0.0
    %372 = vmatprep.subr.mxu0 0.0
    %373 = vmatpush1.msra.mxu0 0.0
    %374 = vmatprep.subr.mxu0 0.0
    %375 = vmatpush1.msra.mxu0 0.0
    %376 = vmatprep.subr.mxu0 0.0
    %377 = vmatpush1.msra.mxu0 0.0
    %378 = vmatprep.subr.mxu0 0.0
    %379 = vmatpush1.msra.mxu0 0.0
    %380 = vmatprep.subr.mxu0 0.0
    %381 = vmatpush1.msra.mxu0 0.0
    %382 = vmatprep.subr.mxu0 0.0
    %383 = vmatpush1.msra.mxu0 0.0
    %384 = vmatprep.mubr.f32.mxu0 0.0
    %385 = vmatmul.mubr.f32.gmra.mrb[0].mxu0 %v318
    %v386 = vpop.f32.mrb[0].mxu0
    %v387 = vadd.f32 0.0, %v386
    %v388 = vpop.f32.mrb[0].mxu0
    %389 = vdwg.mxu0
    %390 = vst.msk [vmem:[%s10] sm:$0xff] %vm306, %v387
    // Predicated region
    $region30: #{tpu_custom_call.1} parent=1 // pred_check
      _
    $region31: #{tpu_custom_call.1} parent=1 // pred_check_branch
      %392 = sbr.rel (0) target = $region33
    $region32: #{tpu_custom_call.1} parent=1 // pred_region
      %s394 = ssub.s32 128, 128
      %395 = vsyncadd [#allocation3], %s394
      %s397 = sshll.u32 [#allocation2], 4
      %s398 = int_to_ptr.vmem [resolvable:$true] %s397
      %400 = dma.vmem_to_hbm [thread:$0]  %s398, 128, %s7, [#allocation3]
    $region33: #{tpu_custom_call.1} parent=1 // pred_fallthru
      _
    // Predicated region
    $region34: #{tpu_custom_call.1} parent=1 // pred_check
      _
    $region35: #{tpu_custom_call.1} parent=1 // pred_check_branch
      %402 = sbr.rel (0) target = $region37
    $region36: #{tpu_custom_call.1} parent=1 // pred_region
      %s404 = ssub.s32 128, 128
      %405 = vsyncadd [#allocation5], %s404
      %s407 = sshll.u32 [#allocation4], 4
      %s408 = int_to_ptr.vmem [resolvable:$true] %s407
      %410 = dma.vmem_to_hbm [thread:$0]  %s408, 128, %s8, [#allocation5]
    $region37: #{tpu_custom_call.1} parent=1 // pred_fallthru
      _
    // Predicated region
    $region38: #{tpu_custom_call.1} parent=1 // pred_check
      _
    $region39: #{tpu_custom_call.1} parent=1 // pred_check_branch
      %412 = sbr.rel (0) target = $region41
    $region40: #{tpu_custom_call.1} parent=1 // pred_region
      _
    $region41: #{tpu_custom_call.1} parent=1 // pred_fallthru
      _
    // Predicated region
    $region42: #{tpu_custom_call.1} parent=1 // pred_check
      _
    $region43: #{tpu_custom_call.1} parent=1 // pred_check_branch
      %414 = sbr.rel (0) target = $region45
    $region44: #{tpu_custom_call.1} parent=1 // pred_region
      _
    $region45: #{tpu_custom_call.1} parent=1 // pred_fallthru
      _
    // Predicated region
    $region46: #{tpu_custom_call.1} parent=1 // pred_check
      _
    $region47: #{tpu_custom_call.1} parent=1 // pred_check_branch
      %416 = sbr.rel (0) target = $region49
    $region48: #{tpu_custom_call.1} parent=1 // pred_region
      %417 = dma.done [#allocation3], 128
    $region49: #{tpu_custom_call.1} parent=1 // pred_fallthru
      _
    // Predicated region
    $region50: #{tpu_custom_call.1} parent=1 // pred_check
      _
    $region51: #{tpu_custom_call.1} parent=1 // pred_check_branch
      %419 = sbr.rel (0) target = $region53
    $region52: #{tpu_custom_call.1} parent=1 // pred_region
      %420 = dma.done [#allocation5], 128
    $region53: #{tpu_custom_call.1} parent=1 // pred_fallthru
      _
    // Predicated region
    $region54: #{tpu_custom_call.1} parent=1 // pred_check
      _
    $region55: #{tpu_custom_call.1} parent=1 // pred_check_branch
      %422 = sbr.rel (0) target = $region57
    $region56: #{tpu_custom_call.1} parent=1 // pred_region
      _
    $region57: #{tpu_custom_call.1} parent=1 // pred_fallthru
      _
    // Predicated region
    $region58: #{tpu_custom_call.1} parent=1 // pred_check
      _
    $region59: #{tpu_custom_call.1} parent=1 // pred_check_branch
      %424 = sbr.rel (0) target = $region61
    $region60: #{tpu_custom_call.1} parent=1 // pred_region
      _
    $region61: #{tpu_custom_call.1} parent=1 // pred_fallthru
      _
    %425 = vsyncpa [#allocation3], 1
    %426 = vsyncpa [#allocation5], 1

</llo_original>
